<compile_context>
chip_gen: v5e
topology: v5e:2x2
jax: 0.10.0
libtpu: 0.0.40
codegen_flags: <defaults>
</compile_context>

<pallas_src>
import jax
import jax.numpy as jnp
from jax.experimental import pallas as pl
from jax.experimental.pallas import tpu as pltpu


# ----------------------------------------------------------------------------
# Pallas kernel: factorized two-stage resample for one (frame, channel) slice
# ----------------------------------------------------------------------------
def _jitter_kernel(im_ref, wy_ref, wx_ref, out_ref):
    # im_ref : (H, W)       image slice for (frame t, channel c)
    # wy_ref : (N*ph, H)    stacked per-patch row (y) resample weights, frame t
    # wx_ref : (N, pw, W)   per-patch column (x) resample weights, frame t
    # out_ref: (N, ph, pw)  jittered patches for this (t, c) slice
    n_patches = wx_ref.shape[0]
    p_h = wy_ref.shape[0] // n_patches

    # Stage 1: contract over y.  One MXU matmul, M = N*ph, K = H, lanes = W.
    tmp = jnp.dot(wy_ref[...], im_ref[...],
                  preferred_element_type=jnp.float32)           # (N*ph, W)
    # Split the leading dim only (minor/lane dim untouched) -> no relayout.
    tmp = tmp.reshape(n_patches, p_h, tmp.shape[-1])            # (N, ph, W)

    # Stage 2: contract over x, batched over the patch axis (leading-batch
    # dot_general, rhs contracted on its minor dim -- MXU-native form).
    out = jnp.einsum('nrw,nqw->nrq', tmp, wx_ref[...],
                     preferred_element_type=jnp.float32)        # (N, ph, pw)
    out_ref[...] = out.astype(out_ref.dtype)


# ----------------------------------------------------------------------------
# Crop sampling + per-axis antialiased-bilinear resample matrices (plain JAX)
# ----------------------------------------------------------------------------
def _axis_weights(full_dim, out_dim, patch_off, crop_off, crop_sz):
    """Per-patch (P, out_dim, full_dim) antialiased-bilinear resize matrix.

    Maps full-image coordinates -> output pixels of the resized crop, where the
    crop lives at [patch_off + crop_off, patch_off + crop_off + crop_sz) on the
    image axis.  Triangle (bilinear) filter, widened by the scale factor when
    downscaling (PIL/torchvision antialias=True behaviour).
    """
    pos = jnp.arange(full_dim, dtype=jnp.float32)[None, None, :]          # (1,1,F)
    kk = pos - patch_off[:, None, None].astype(jnp.float32) \
             - crop_off[:, None, None].astype(jnp.float32)                # crop-rel coord
    csz = crop_sz[:, None, None].astype(jnp.float32)
    valid = (kk >= 0.0) & (kk < csz)

    scale = csz / float(out_dim)                                          # (P,1,1)
    support = jnp.maximum(scale, 1.0)
    o = jnp.arange(out_dim, dtype=jnp.float32)[None, :, None]             # (1,O,1)
    center = (o + 0.5) * scale
    x = (kk + 0.5 - center) / support
    w = jnp.maximum(0.0, 1.0 - jnp.abs(x)) * valid.astype(jnp.float32)
    # NOTE: if a row ever had zero support (not reachable with crops inside the
    # patch) it silently becomes all-zeros rather than erroring.
    w = w / jnp.maximum(jnp.sum(w, axis=-1, keepdims=True), 1e-8)
    return w.astype(jnp.float32)                                          # (P,O,F)


def _build_stacked_weights(key, T, N, nH, nW, size, stride, H, W, scale, ratio):
    """Sample crop params and build per-frame stacked resample matrices.

    Returns:
      wy_f: (T, N*ph, H) float32 -- per-frame stack of row-resample matrices.
      wx_s: (T, N, pw, W) float32 -- per-frame per-patch column-resample mats.
    """
    ph, pw = size
    P = T * N
    # unfold ordering: width fastest -> n = row * nW + col
    rows = (jnp.arange(N) // nW) * stride[0]
    cols = (jnp.arange(N) % nW) * stride[1]
    row_off = jnp.tile(rows, T).astype(jnp.int32)   # (P,), p = t*N + n
    col_off = jnp.tile(cols, T).astype(jnp.int32)

    k1, k2, k3, k4 = jax.random.split(key, 4)
    area = float(ph * pw)
    s = jax.random.uniform(k1, (P,), minval=scale[0], maxval=scale[1])
    logr = jax.random.uniform(k2, (P,), minval=jnp.log(ratio[0]),
                              maxval=jnp.log(ratio[1]))
    r = jnp.exp(logr)
    target_area = area * s
    crop_h = jnp.clip(jnp.round(jnp.sqrt(target_area / r)), 1, ph).astype(jnp.int32)
    crop_w = jnp.clip(jnp.round(jnp.sqrt(target_area * r)), 1, pw).astype(jnp.int32)
    ui = jax.random.uniform(k3, (P,))
    uj = jax.random.uniform(k4, (P,))
    i0 = jnp.floor(ui * (ph - crop_h + 1).astype(jnp.float32)).astype(jnp.int32)
    j0 = jnp.floor(uj * (pw - crop_w + 1).astype(jnp.float32)).astype(jnp.int32)

    wy = _axis_weights(H, ph, row_off, i0, crop_h)   # (P, ph, H)
    wx = _axis_weights(W, pw, col_off, j0, crop_w)   # (P, pw, W)
    wy_f = wy.reshape(T, N * ph, H)
    wx_s = wx.reshape(T, N, pw, W)
    return wy_f, wx_s


# ----------------------------------------------------------------------------
# Module wrapper
# ----------------------------------------------------------------------------
def patch_and_jitter(im, key, *, size=64, stride=32, scale=(0.7, 0.9),
                     ratio=(0.8, 1.2)):
    """JAX/Pallas equivalent of PatchAndJitter.forward.

    im : (T, C, H, W) array.
    Returns (pats, tgts): pats (T, N, C, ph, pw) in im.dtype, tgts (N,) int32.
    """
    size = (size, size) if isinstance(size, int) else tuple(size)
    stride = (stride, stride) if isinstance(stride, int) else tuple(stride)
    T, C, H, W = im.shape
    ph, pw = size
    nH = (H - ph) // stride[0] + 1
    nW = (W - pw) // stride[1] + 1
    N = nH * nW

    # Per-frame stacked resample weights, kept in f32 (rows must sum to 1).
    wy_f, wx_s = _build_stacked_weights(key, T, N, nH, nW, size, stride,
                                        H, W, scale, ratio)

    out_dtype = im.dtype
    itemsize = im.dtype.itemsize
    flops = 2 * T * C * N * ph * W * (H + pw)          # stage 1 + stage 2
    bytes_accessed = int(im.size * itemsize + wy_f.size * 4 + wx_s.size * 4
                         + T * C * N * ph * pw * itemsize)

    out = pl.pallas_call(
        _jitter_kernel,
        out_shape=jax.ShapeDtypeStruct((T, C, N, ph, pw), out_dtype),
        grid=(T, C),   # C innermost: per-frame weight blocks stay resident
        in_specs=[
            pl.BlockSpec((None, None, H, W), lambda t, c: (t, c, 0, 0)),
            pl.BlockSpec((None, N * ph, H), lambda t, c: (t, 0, 0)),
            pl.BlockSpec((None, N, pw, W), lambda t, c: (t, 0, 0, 0)),
        ],
        out_specs=pl.BlockSpec((None, None, N, ph, pw),
                               lambda t, c: (t, c, 0, 0, 0)),
        compiler_params=pltpu.CompilerParams(
            dimension_semantics=("parallel", "parallel")),
        cost_estimate=pl.CostEstimate(flops=flops, transcendentals=0,
                                      bytes_accessed=bytes_accessed),
    )(im, wy_f, wx_s)

    # Layout plumbing only: (T, C, N, ph, pw) -> (T, N, C, ph, pw).
    pats = out.transpose(0, 2, 1, 3, 4)
    tgts = jnp.arange(N, dtype=jnp.int32)
    return pats, tgts


if __name__ == "__main__":
    key = jax.random.PRNGKey(0)
    k_im, k_jit = jax.random.split(key)

    # Small shapes consistent with the module: TCHW video, 16x16 frames,
    # patch size 8, stride 4 -> N = 3*3 = 9 patches per frame.
    T, C, H, W = 2, 4, 16, 16
    ph = pw = 8
    sh = sw = 4
    scale = (0.7, 0.9)
    ratio = (0.8, 1.2)
    im = jax.random.normal(k_im, (T, C, H, W), dtype=jnp.float32)

    pats, tgts = patch_and_jitter(im, k_jit, size=(ph, pw), stride=(sh, sw),
                                  scale=scale, ratio=ratio)
    pats = jax.block_until_ready(pats)
    tgts = jax.block_until_ready(tgts)

    nH = (H - ph) // sh + 1
    nW = (W - pw) // sw + 1
    N = nH * nW
    assert pats.shape == (T, N, C, ph, pw), pats.shape
    assert tgts.shape == (N,), tgts.shape
    assert bool(jnp.all(tgts == jnp.arange(N)))

    # Pure-JAX f32 reference: rebuild the same (deterministic) weights and
    # apply the separable transform with a dense einsum.
    wy_f, wx_s = _build_stacked_weights(k_jit, T, N, nH, nW, (ph, pw),
                                        (sh, sw), H, W, scale, ratio)
    wy4 = wy_f.reshape(T, N, ph, H)
    ref = jnp.einsum('tnry,tcyx,tnqx->tncrq', wy4, im, wx_s)
    assert jnp.allclose(pats, ref, atol=2e-2, rtol=2e-2), \
        float(jnp.max(jnp.abs(pats - ref)))

    print("KERNEL_OK")
</pallas_src>

<mosaic_0001>
module attributes {stable_mosaic.version = 11 : i64} {
  func.func @_jitter_kernel(%arg0: i32, %arg1: i32, %arg2: memref<1x1x16x16xf32, #tpu.memory_space<vmem>>, %arg3: memref<1x72x16xf32, #tpu.memory_space<vmem>>, %arg4: memref<1x9x8x16xf32, #tpu.memory_space<vmem>>, %arg5: memref<1x1x9x8x8xf32, #tpu.memory_space<vmem>>) attributes {dimension_semantics = [#tpu.dimension_semantics<parallel>, #tpu.dimension_semantics<parallel>], iteration_bounds = array<i64: 2, 4>, scalar_prefetch = 0 : i64, scratch_operands = 0 : i64, tpu.core_type = #tpu.core_type<tc>, window_params = [{transform_indices = @transform_0, window_bounds = array<i64: 1, 1, 16, 16>}, {transform_indices = @transform_1, window_bounds = array<i64: 1, 72, 16>}, {transform_indices = @transform_2, window_bounds = array<i64: 1, 9, 8, 16>}, {transform_indices = @transform_3, window_bounds = array<i64: 1, 1, 9, 8, 8>}]} {
    %c0 = arith.constant 0 : index
    %c0_0 = arith.constant 0 : index
    %c0_1 = arith.constant 0 : index
    %0 = vector.load %arg3[%c0, %c0_0, %c0_1] : memref<1x72x16xf32, #tpu.memory_space<vmem>>, vector<1x72x16xf32>
    %1 = vector.shape_cast %0 : vector<1x72x16xf32> to vector<72x16xf32>
    %c0_2 = arith.constant 0 : index
    %c0_3 = arith.constant 0 : index
    %c0_4 = arith.constant 0 : index
    %c0_5 = arith.constant 0 : index
    %2 = vector.load %arg2[%c0_2, %c0_3, %c0_4, %c0_5] : memref<1x1x16x16xf32, #tpu.memory_space<vmem>>, vector<1x1x16x16xf32>
    %3 = vector.shape_cast %2 : vector<1x1x16x16xf32> to vector<16x16xf32>
    %cst = arith.constant dense<0.000000e+00> : vector<72x16xf32>
    %4 = tpu.matmul %1, %3, %cst {dimension_numbers = #tpu.dot_dimension_numbers<[1], [0], [0], [1], [0, 0, 1, 1], [], []>} : vector<72x16xf32>, vector<16x16xf32>, vector<72x16xf32> -> vector<72x16xf32>
    %5 = vector.shape_cast %4 : vector<72x16xf32> to vector<9x8x16xf32>
    %c0_6 = arith.constant 0 : index
    %c0_7 = arith.constant 0 : index
    %c0_8 = arith.constant 0 : index
    %c0_9 = arith.constant 0 : index
    %6 = vector.load %arg4[%c0_6, %c0_7, %c0_8, %c0_9] : memref<1x9x8x16xf32, #tpu.memory_space<vmem>>, vector<1x9x8x16xf32>
    %7 = vector.shape_cast %6 : vector<1x9x8x16xf32> to vector<9x8x16xf32>
    "tpu.trace_start"() <{level = 10 : i32, message = "nrw,nqw->nrq"}> : () -> ()
    %cst_10 = arith.constant dense<0.000000e+00> : vector<9x8x8xf32>
    %8 = tpu.matmul %5, %7, %cst_10 {dimension_numbers = #tpu.dot_dimension_numbers<[2], [2], [1], [1], [0, 0, 0, 1, 1, 1], [0], [0]>} : vector<9x8x16xf32>, vector<9x8x16xf32>, vector<9x8x8xf32> -> vector<9x8x8xf32>
    "tpu.trace_stop"() : () -> ()
    %c0_11 = arith.constant 0 : index
    %c0_12 = arith.constant 0 : index
    %c0_13 = arith.constant 0 : index
    %c0_14 = arith.constant 0 : index
    %c0_15 = arith.constant 0 : index
    %9 = vector.load %arg5[%c0_11, %c0_12, %c0_13, %c0_14, %c0_15] : memref<1x1x9x8x8xf32, #tpu.memory_space<vmem>>, vector<1x1x9x8x8xf32>
    %10 = vector.shape_cast %9 : vector<1x1x9x8x8xf32> to vector<9x8x8xf32>
    %11 = vector.shape_cast %8 : vector<9x8x8xf32> to vector<1x1x9x8x8xf32>
    tpu.vector_store %arg5[%c0_11, %c0_12, %c0_13, %c0_14, %c0_15], %11 {strides = array<i32>} : memref<1x1x9x8x8xf32, #tpu.memory_space<vmem>>, vector<1x1x9x8x8xf32>,
    return
  }
  func.func @transform_0(%arg0: i32, %arg1: i32) -> (i32, i32, i32, i32) {
    %c0_i32 = arith.constant 0 : i32
    %c0_i32_0 = arith.constant 0 : i32
    %c0_i32_1 = arith.constant 0 : i32
    return %arg0, %arg1, %c0_i32, %c0_i32_0 : i32, i32, i32, i32
  }
  func.func @transform_1(%arg0: i32, %arg1: i32) -> (i32, i32, i32) {
    %c0_i32 = arith.constant 0 : i32
    %c0_i32_0 = arith.constant 0 : i32
    %c0_i32_1 = arith.constant 0 : i32
    return %arg0, %c0_i32, %c0_i32_0 : i32, i32, i32
  }
  func.func @transform_2(%arg0: i32, %arg1: i32) -> (i32, i32, i32, i32) {
    %c0_i32 = arith.constant 0 : i32
    %c0_i32_0 = arith.constant 0 : i32
    %c0_i32_1 = arith.constant 0 : i32
    %c0_i32_2 = arith.constant 0 : i32
    return %arg0, %c0_i32, %c0_i32_0, %c0_i32_1 : i32, i32, i32, i32
  }
  func.func @transform_3(%arg0: i32, %arg1: i32) -> (i32, i32, i32, i32, i32) {
    %c0_i32 = arith.constant 0 : i32
    %c0_i32_0 = arith.constant 0 : i32
    %c0_i32_1 = arith.constant 0 : i32
    %c0_i32_2 = arith.constant 0 : i32
    return %arg0, %arg1, %c0_i32, %c0_i32_0, %c0_i32_1 : i32, i32, i32, i32, i32
  }
}

</mosaic_0001>

<llo_original>
// kernel: tpu_custom_call.1
$region0: #{tpu_custom_call.1}
  #allocation0 [shape = 'u32[]', space=smem, size = 0x4, offset = 0x4, fixed_abs, tag = 'smem constant byte address 0x4 - core index']
  #allocation1 [shape = 'u32[72,128]{1,0:T(1,128)}', space=vmem, size = 0x9000, scoped, tag = 'internal scratch']
  %s0 = inlined_call_operand.hbm [shape: f32[2,4,16,16], index: 0, kind: input, shape index: {}]
  %s1 = inlined_call_operand.vmem [shape: f32[2,72,16], index: 1, kind: input, shape index: {}]
  %s2 = inlined_call_operand.vmem [shape: f32[2,9,8,16], index: 2, kind: input, shape index: {}]
  %s3 = inlined_call_operand.vmem [shape: f32[2,4,9,8,8], index: 3, kind: output, shape index: {}]
  %s4 = sld [smem:[#allocation0]]
  $region49: #{tpu_custom_call.1} parent=0
    _
  %s6 = ssub.s32 1, %s4
  %s7 = scalar_select 0, %s6, %s4
  $region1: #{tpu_custom_call.1} parent=0
    #allocation2 [shape = 'u8[16384]{0}', space=vmem, size = 0x4000, scoped, tag = 'input window, operand 0']
    #allocation3 [shape = 's32[2]{0}', space=sflag, size = 0x8, scoped, tag = 'scoped memory for tpu_custom_call.1']
    %8 = vsyncpa [#allocation3], 0
    %s9 = scalar_lea.sflag [#allocation3], 1
    %10 = vsyncpa %s9, 0
    loop: start=0, step=1, limit=10
    $region2: #{tpu_custom_call.1} parent=1 // loop_pre_header
      _
    $region3: #{tpu_custom_call.1} parent=1 // loop_header
      %s12 = sphi 0, %s16
      %p13 = scmp.ge.s32.totalorder %s12, 10
      %s19 = sphi 0, %s31
      %s20 = sphi 0, %s27
      %s21 = sphi 0, %s19
      %s22 = sphi 0, %s20
      %s23 = sphi 0, %s21
      %s24 = sphi 0, %s22
      %s36 = sphi 0, %s38
      %s39 = sphi 0, %s36
      %s40 = sphi 0, %s39
      %s56 = sphi 0, %s40
      %s62 = sphi 0, %s64
      %s65 = sphi 0, %s62
      %s66 = sphi 0, %s65
      %s82 = sphi 0, %s66
      %s88 = sphi 0, %s90
      %s91 = sphi 0, %s88
      %s92 = sphi 0, %s91
      %s108 = sphi 0, %s92
      %s116 = sphi 0, %s118
      %s119 = sphi 0, %s116
      %s120 = sphi 0, %s119
      %s136 = sphi 0, %s120
    $region4: #{tpu_custom_call.1} parent=1 // loop_header_branch
      %15 = sbr.rel (%p13) target = $region8
    $region5: #{tpu_custom_call.1} parent=1 // loop_body
      %s17 = ssub.s32 %s12, 1
      %s18 = ssub.s32 %s12, 2
      %s25 = sadd.s32 1, %s20
      %p26 = scmp.ge.s32.totalorder %s25, 4
      %s27 = scalar_select %p26, 0, %s25
      %s28 = sadd.s32 1, %s19
      %s29 = scalar_select %p26, %s28, %s19
      %p30 = scmp.ge.s32.totalorder %s29, 2
      %s31 = scalar_select %p30, 0, %s29
      %s32 = ssub.s32 %s19, %s31
      %s33 = ssub.s32 %s20, %s27
      %s34 = sor.u32 %s32, %s33
      %p35 = scmp.eq.s32.totalorder %s34, 0
      %s37 = sadd.s32 %s36, 1
      %s38 = scalar_select %p35, %s36, %s37
      %p41 = pneg %p35
      %p42 = scmp.eq.s32.totalorder %s12, 7
      %p43 = por %p41, %p42
      %p44 = scmp.ne.s32.totalorder %s36, %s39
      %p45 = scmp.eq.s32.totalorder %s12, 0
      %p46 = por %p44, %p45
      %p47 = scmp.ne.s32.totalorder %s36, %s39
      %p48 = scmp.eq.s32.totalorder %s17, 7
      %p49 = por %p47, %p48
      %p50 = scmp.ne.s32.totalorder %s39, %s40
      %p51 = scmp.eq.s32.totalorder %s17, 0
      %p52 = por %p50, %p51
      %p53 = scmp.ne.s32.totalorder %s39, %s40
      %p54 = scmp.eq.s32.totalorder %s18, 7
      %p55 = por %p53, %p54
      %p57 = scmp.ne.s32.totalorder %s40, %s56
      %p58 = scmp.eq.s32.totalorder %s18, 0
      %p59 = por %p57, %p58
      %s60 = ssub.s32 %s19, %s31
      %p61 = scmp.eq.s32.totalorder %s60, 0
      %s63 = sadd.s32 %s62, 1
      %s64 = scalar_select %p61, %s62, %s63
      %p67 = pneg %p61
      %p68 = scmp.eq.s32.totalorder %s12, 7
      %p69 = por %p67, %p68
      %p70 = scmp.ne.s32.totalorder %s62, %s65
      %p71 = scmp.eq.s32.totalorder %s12, 0
      %p72 = por %p70, %p71
      %p73 = scmp.ne.s32.totalorder %s62, %s65
      %p74 = scmp.eq.s32.totalorder %s17, 7
      %p75 = por %p73, %p74
      %p76 = scmp.ne.s32.totalorder %s65, %s66
      %p77 = scmp.eq.s32.totalorder %s17, 0
      %p78 = por %p76, %p77
      %p79 = scmp.ne.s32.totalorder %s65, %s66
      %p80 = scmp.eq.s32.totalorder %s18, 7
      %p81 = por %p79, %p80
      %p83 = scmp.ne.s32.totalorder %s66, %s82
      %p84 = scmp.eq.s32.totalorder %s18, 0
      %p85 = por %p83, %p84
      %s86 = ssub.s32 %s19, %s31
      %p87 = scmp.eq.s32.totalorder %s86, 0
      %s89 = sadd.s32 %s88, 1
      %s90 = scalar_select %p87, %s88, %s89
      %p93 = pneg %p87
      %p94 = scmp.eq.s32.totalorder %s12, 7
      %p95 = por %p93, %p94
      %p96 = scmp.ne.s32.totalorder %s88, %s91
      %p97 = scmp.eq.s32.totalorder %s12, 0
      %p98 = por %p96, %p97
      %p99 = scmp.ne.s32.totalorder %s88, %s91
      %p100 = scmp.eq.s32.totalorder %s17, 7
      %p101 = por %p99, %p100
      %p102 = scmp.ne.s32.totalorder %s91, %s92
      %p103 = scmp.eq.s32.totalorder %s17, 0
      %p104 = por %p102, %p103
      %p105 = scmp.ne.s32.totalorder %s91, %s92
      %p106 = scmp.eq.s32.totalorder %s18, 7
      %p107 = por %p105, %p106
      %p109 = scmp.ne.s32.totalorder %s92, %s108
      %p110 = scmp.eq.s32.totalorder %s18, 0
      %p111 = por %p109, %p110
      %s112 = ssub.s32 %s19, %s31
      %s113 = ssub.s32 %s20, %s27
      %s114 = sor.u32 %s112, %s113
      %p115 = scmp.eq.s32.totalorder %s114, 0
      %s117 = sadd.s32 %s116, 1
      %s118 = scalar_select %p115, %s116, %s117
      %p121 = pneg %p115
      %p122 = scmp.eq.s32.totalorder %s12, 7
      %p123 = por %p121, %p122
      %p124 = scmp.ne.s32.totalorder %s116, %s119
      %p125 = scmp.eq.s32.totalorder %s12, 0
      %p126 = por %p124, %p125
      %p127 = scmp.ne.s32.totalorder %s116, %s119
      %p128 = scmp.eq.s32.totalorder %s17, 7
      %p129 = por %p127, %p128
      %p130 = scmp.ne.s32.totalorder %s119, %s120
      %p131 = scmp.eq.s32.totalorder %s17, 0
      %p132 = por %p130, %p131
      %p133 = scmp.ne.s32.totalorder %s119, %s120
      %p134 = scmp.eq.s32.totalorder %s18, 7
      %p135 = por %p133, %p134
      %p137 = scmp.ne.s32.totalorder %s120, %s136
      %p138 = scmp.eq.s32.totalorder %s18, 0
      %p139 = por %p137, %p138
      %p140 = scmp.le.s32.totalorder 1, %s12
      %p141 = scmp.lt.s32.totalorder %s12, 9
      %p142 = pnand %p140, %p141
      %p143 = pneg %p142
      // Predicated region
      $region9: #{tpu_custom_call.1} parent=5 // pred_check
        _
      $region10: #{tpu_custom_call.1} parent=5 // pred_check_branch
        %145 = sbr.rel (%p142) target = $region12
      $region11: #{tpu_custom_call.1} parent=5 // pred_region
        %s146 = ssub.s32 %s12, 1
      $region12: #{tpu_custom_call.1} parent=5 // pred_fallthru
        _
      %p147 = scmp.lt.s32.totalorder %s12, 8
      // Predicated region
      $region13: #{tpu_custom_call.1} parent=5 // pred_check
        %p148 = pneg %p147
      $region14: #{tpu_custom_call.1} parent=5 // pred_check_branch
        %150 = sbr.rel (%p148) target = $region16
      $region15: #{tpu_custom_call.1} parent=5 // pred_region
        // Predicated region
        $region17: #{tpu_custom_call.1} parent=15 // pred_check
          %p151 = pneg %p46
        $region18: #{tpu_custom_call.1} parent=15 // pred_check_branch
          %153 = sbr.rel (%p151) target = $region20
        $region19: #{tpu_custom_call.1} parent=15 // pred_region
          %s154 = sand.u32 %s36, 1
          %s155 = scalar_lea.sflag [#allocation3], %s154
          %s156 = sand.u32 %s36, 1
          %s157 = smul.addr %s156, 16
          %s158 = scalar_lea.vmem [#allocation2], %s157
          %160 = vsyncadd %s155, 0
          %s161 = smul.addr %s20, 2
          %s162 = smul.addr %s19, 8
          %s163 = sadd.s32 %s161, %s162
          %s164 = smul.addr %s163, 8
          %s165 = scalar_lea.hbm %s0, %s164
          %s166 = sshll.u32 %s165, 4
          %s167 = int_to_ptr.hbm [resolvable:$true] %s166
          %s168 = sshll.u32 %s158, 4
          %s169 = int_to_ptr.vmem [resolvable:$true] %s168
          %174 = dma.hbm_to_vmem [thread:$0]  %s167, 256, %s169, %s155, 128, 128, 8
        $region20: #{tpu_custom_call.1} parent=15 // pred_fallthru
          _
        // Predicated region
        $region21: #{tpu_custom_call.1} parent=15 // pred_check
          %p175 = pneg %p72
        $region22: #{tpu_custom_call.1} parent=15 // pred_check_branch
          %177 = sbr.rel (%p175) target = $region24
        $region23: #{tpu_custom_call.1} parent=15 // pred_region
          %p178 = scmp.lt.s32.totalorder %s19, 1
          %s179 = scalar_select %p178, %s19, 1
          %s180 = smul.addr %s179, 9
          %s181 = smul.addr %s180, 8
          %s182 = scalar_lea.vmem %s1, %s181
        $region24: #{tpu_custom_call.1} parent=15 // pred_fallthru
          _
        // Predicated region
        $region25: #{tpu_custom_call.1} parent=15 // pred_check
          %p183 = pneg %p98
        $region26: #{tpu_custom_call.1} parent=15 // pred_check_branch
          %185 = sbr.rel (%p183) target = $region28
        $region27: #{tpu_custom_call.1} parent=15 // pred_region
          %p186 = scmp.lt.s32.totalorder %s19, 1
          %s187 = scalar_select %p186, %s19, 1
          %s188 = smul.addr %s187, 9
          %s189 = smul.addr %s188, 8
          %s190 = scalar_lea.vmem %s2, %s189
        $region28: #{tpu_custom_call.1} parent=15 // pred_fallthru
          _
      $region16: #{tpu_custom_call.1} parent=5 // pred_fallthru
        _
      %p191 = scmp.le.s32.totalorder 1, %s12
      %p192 = scmp.lt.s32.totalorder %s12, 9
      %p193 = pnand %p191, %p192
      %p194 = pneg %p193
      // Predicated region
      $region29: #{tpu_custom_call.1} parent=5 // pred_check
        _
      $region30: #{tpu_custom_call.1} parent=5 // pred_check_branch
        %196 = sbr.rel (%p193) target = $region32
      $region31: #{tpu_custom_call.1} parent=5 // pred_region
        %s197 = ssub.s32 %s12, 1
        %s198 = sand.u32 %s39, 1
        %s199 = scalar_lea.sflag [#allocation3], %s198
        %s200 = sand.u32 %s39, 1
        %s201 = smul.addr %s200, 16
        %s202 = scalar_lea.vmem [#allocation2], %s201
        // Predicated region
        $region33: #{tpu_custom_call.1} parent=31 // pred_check
          %p203 = pneg %p52
        $region34: #{tpu_custom_call.1} parent=31 // pred_check_branch
          %205 = sbr.rel (%p203) target = $region36
        $region35: #{tpu_custom_call.1} parent=31 // pred_region
          %207 = dma.done %s199, 256
        $region36: #{tpu_custom_call.1} parent=31 // pred_fallthru
          _
        %s208 = sand.u32 %s39, 1
        %s209 = scalar_lea.sflag [#allocation3], %s208
        %s210 = sand.u32 %s39, 1
        %s211 = smul.addr %s210, 16
        %s212 = scalar_lea.vmem [#allocation2], %s211
        %p213 = pneg %p52
        %p214 = pneg %p49
        %p215 = scmp.lt.s32.totalorder %s21, 1
        %s216 = scalar_select %p215, %s21, 1
        %s217 = smul.addr %s216, 9
        %s218 = smul.addr %s217, 8
        %s219 = scalar_lea.vmem %s1, %s218
        %p220 = pneg %p78
        %p221 = pneg %p75
        %p222 = scmp.lt.s32.totalorder %s21, 1
        %s223 = scalar_select %p222, %s21, 1
        %s224 = smul.addr %s223, 9
        %s225 = smul.addr %s224, 8
        %s226 = scalar_lea.vmem %s2, %s225
        %p227 = pneg %p104
        %p228 = pneg %p101
        %p229 = pneg %p132
        %p230 = pneg %p129
        %p231 = scmp.lt.s32.totalorder %s21, 1
        %s232 = scalar_select %p231, %s21, 1
        %p233 = scmp.lt.s32.totalorder %s22, 3
        %s234 = scalar_select %p233, %s22, 3
        %s235 = smul.addr %s234, 9
        %s236 = smul.addr %s232, 36
        %s237 = sadd.s32 %s235, %s236
        %s238 = smul.addr %s237, 8
        %s239 = scalar_lea.vmem %s3, %s238
        %p240 = scmp.lt.s32.totalorder %s21, 1
        %s241 = scalar_select %p240, %s21, 1
        %s242 = smul.addr %s241, 9
        %s243 = smul.addr %s242, 8
        %s244 = scalar_lea.vmem %s1, %s243
        %p245 = scmp.lt.s32.totalorder %s21, 1
        %s246 = scalar_select %p245, %s21, 1
        %s247 = smul.addr %s246, 9
        %s248 = smul.addr %s247, 8
        %s249 = scalar_lea.vmem %s2, %s248
        %p250 = scmp.lt.s32.totalorder %s21, 1
        %s251 = scalar_select %p250, %s21, 1
        %p252 = scmp.lt.s32.totalorder %s22, 3
        %s253 = scalar_select %p252, %s22, 3
        %s254 = smul.addr %s253, 9
        %s255 = smul.addr %s251, 36
        %s256 = sadd.s32 %s254, %s255
        %s257 = smul.addr %s256, 8
        %s258 = scalar_lea.vmem %s3, %s257
        %v259 = vld [vmem:[%s244] sm:$0xff]
        %v260 = vld [vmem:[%s244 + $0x8] sm:$0xff]
        %v261 = vld [vmem:[%s244 + $0x10] sm:$0xff]
        %v262 = vld [vmem:[%s244 + $0x18] sm:$0xff]
        %v263 = vld [vmem:[%s244 + $0x20] sm:$0xff]
        %v264 = vld [vmem:[%s244 + $0x28] sm:$0xff]
        %v265 = vld [vmem:[%s244 + $0x30] sm:$0xff]
        %v266 = vld [vmem:[%s244 + $0x38] sm:$0xff]
        %v267 = vld [vmem:[%s244 + $0x40] sm:$0xff]
        %v268 = vld [vmem:[%s202] sm:$0xff]
        %v269 = vld [vmem:[%s202 + $0x8] sm:$0xff]
        %vm270 = vcmask 130048
        %v272 = vsel %vm270, %v259, 0
        %v275 = vsel %vm270, %v260, 0
        %v278 = vsel %vm270, %v261, 0
        %v281 = vsel %vm270, %v262, 0
        %v284 = vsel %vm270, %v263, 0
        %v287 = vsel %vm270, %v264, 0
        %v290 = vsel %vm270, %v265, 0
        %v293 = vsel %vm270, %v266, 0
        %v296 = vsel %vm270, %v267, 0
        %298 = vmatpush.msra.mxu0 0.0
        %299 = vmatpush.msra.mxu0 0.0
        %300 = vmatpush.msra.mxu0 0.0
        %301 = vmatpush.msra.mxu0 0.0
        %302 = vmatpush.msra.mxu0 0.0
        %303 = vmatpush.msra.mxu0 0.0
        %304 = vmatpush.msra.mxu0 0.0
        %305 = vmatpush.msra.mxu0 0.0
        %306 = vmatpush.msra.mxu0 0.0
        %307 = vmatpush.msra.mxu0 0.0
        %308 = vmatpush.msra.mxu0 0.0
        %309 = vmatpush.msra.mxu0 0.0
        %310 = vmatpush.msra.mxu0 0.0
        %311 = vmatpush.msra.mxu0 0.0
        %312 = vmatpush.msra.mxu0 %v269
        %313 = vmatpush.msra.mxu0 %v268
        %314 = vmatmul.f32.gmra.mxu0 %v272
        %v315 = vpop.f32.mrf.mxu0
        %v316 = vadd.f32 0.0, %v315
        %317 = vmatmul.f32.gmra.mxu0 %v275
        %v318 = vpop.f32.mrf.mxu0
        %v319 = vadd.f32 0.0, %v318
        %320 = vmatmul.f32.gmra.mxu0 %v278
        %v321 = vpop.f32.mrf.mxu0
        %v322 = vadd.f32 0.0, %v321
        %323 = vmatmul.f32.gmra.mxu0 %v281
        %v324 = vpop.f32.mrf.mxu0
        %v325 = vadd.f32 0.0, %v324
        %326 = vmatmul.f32.gmra.mxu0 %v284
        %v327 = vpop.f32.mrf.mxu0
        %v328 = vadd.f32 0.0, %v327
        %329 = vmatmul.f32.gmra.mxu0 %v287
        %v330 = vpop.f32.mrf.mxu0
        %v331 = vadd.f32 0.0, %v330
        %332 = vmatmul.f32.gmra.mxu0 %v290
        %v333 = vpop.f32.mrf.mxu0
        %v334 = vadd.f32 0.0, %v333
        %335 = vmatmul.f32.gmra.mxu0 %v293
        %v336 = vpop.f32.mrf.mxu0
        %v337 = vadd.f32 0.0, %v336
        %338 = vmatmul.f32.gmra.mxu0 %v296
        %v339 = vpop.f32.mrf.mxu0
        %v340 = vadd.f32 0.0, %v339
        %341 = vdwg.mxu0
        %v342 = vld [vmem:[%s249] sm:$0xff]
        %v343 = vld [vmem:[%s249 + $0x8] sm:$0xff]
        %v344 = vld [vmem:[%s249 + $0x10] sm:$0xff]
        %v345 = vld [vmem:[%s249 + $0x18] sm:$0xff]
        %v346 = vld [vmem:[%s249 + $0x20] sm:$0xff]
        %v347 = vld [vmem:[%s249 + $0x28] sm:$0xff]
        %v348 = vld [vmem:[%s249 + $0x30] sm:$0xff]
        %v349 = vld [vmem:[%s249 + $0x38] sm:$0xff]
        %v350 = vld [vmem:[%s249 + $0x40] sm:$0xff]
        %v352 = vsel %vm270, %v316, 0
        %v355 = vsel %vm270, %v342, 0
        %357 = vmatpush.xpose.msra.mxu0 0.0
        %358 = vmatpush.xpose.msra.mxu0 0.0
        %359 = vmatpush.xpose.msra.mxu0 0.0
        %360 = vmatpush.xpose.msra.mxu0 0.0
        %361 = vmatpush.xpose.msra.mxu0 0.0
        %362 = vmatpush.xpose.msra.mxu0 0.0
        %363 = vmatpush.xpose.msra.mxu0 0.0
        %364 = vmatpush.xpose.msra.mxu0 0.0
        %365 = vmatpush.xpose.msra.mxu0 0.0
        %366 = vmatpush.xpose.msra.mxu0 0.0
        %367 = vmatpush.xpose.msra.mxu0 0.0
        %368 = vmatpush.xpose.msra.mxu0 0.0
        %369 = vmatpush.xpose.msra.mxu0 0.0
        %370 = vmatpush.xpose.msra.mxu0 0.0
        %371 = vmatpush.xpose.msra.mxu0 0.0
        %372 = vmatpush.xpose.msra.mxu0 %v355
        %373 = vmatmul.f32.gmra.mxu0 %v352
        %v374 = vpop.f32.mrf.mxu0
        %v375 = vadd.f32 0.0, %v374
        %376 = vdwg.mxu0
        %v378 = vsel %vm270, %v319, 0
        %v381 = vsel %vm270, %v343, 0
        %383 = vmatpush.xpose.msra.mxu0 0.0
        %384 = vmatpush.xpose.msra.mxu0 0.0
        %385 = vmatpush.xpose.msra.mxu0 0.0
        %386 = vmatpush.xpose.msra.mxu0 0.0
        %387 = vmatpush.xpose.msra.mxu0 0.0
        %388 = vmatpush.xpose.msra.mxu0 0.0
        %389 = vmatpush.xpose.msra.mxu0 0.0
        %390 = vmatpush.xpose.msra.mxu0 0.0
        %391 = vmatpush.xpose.msra.mxu0 0.0
        %392 = vmatpush.xpose.msra.mxu0 0.0
        %393 = vmatpush.xpose.msra.mxu0 0.0
        %394 = vmatpush.xpose.msra.mxu0 0.0
        %395 = vmatpush.xpose.msra.mxu0 0.0
        %396 = vmatpush.xpose.msra.mxu0 0.0
        %397 = vmatpush.xpose.msra.mxu0 0.0
        %398 = vmatpush.xpose.msra.mxu0 %v381
        %399 = vmatmul.f32.gmra.mxu0 %v378
        %v400 = vpop.f32.mrf.mxu0
        %v401 = vadd.f32 0.0, %v400
        %402 = vdwg.mxu0
        %v404 = vsel %vm270, %v322, 0
        %v407 = vsel %vm270, %v344, 0
        %409 = vmatpush.xpose.msra.mxu0 0.0
        %410 = vmatpush.xpose.msra.mxu0 0.0
        %411 = vmatpush.xpose.msra.mxu0 0.0
        %412 = vmatpush.xpose.msra.mxu0 0.0
        %413 = vmatpush.xpose.msra.mxu0 0.0
        %414 = vmatpush.xpose.msra.mxu0 0.0
        %415 = vmatpush.xpose.msra.mxu0 0.0
        %416 = vmatpush.xpose.msra.mxu0 0.0
        %417 = vmatpush.xpose.msra.mxu0 0.0
        %418 = vmatpush.xpose.msra.mxu0 0.0
        %419 = vmatpush.xpose.msra.mxu0 0.0
        %420 = vmatpush.xpose.msra.mxu0 0.0
        %421 = vmatpush.xpose.msra.mxu0 0.0
        %422 = vmatpush.xpose.msra.mxu0 0.0
        %423 = vmatpush.xpose.msra.mxu0 0.0
        %424 = vmatpush.xpose.msra.mxu0 %v407
        %425 = vmatmul.f32.gmra.mxu0 %v404
        %v426 = vpop.f32.mrf.mxu0
        %v427 = vadd.f32 0.0, %v426
        %428 = vdwg.mxu0
        %v430 = vsel %vm270, %v325, 0
        %v433 = vsel %vm270, %v345, 0
        %435 = vmatpush.xpose.msra.mxu0 0.0
        %436 = vmatpush.xpose.msra.mxu0 0.0
        %437 = vmatpush.xpose.msra.mxu0 0.0
        %438 = vmatpush.xpose.msra.mxu0 0.0
        %439 = vmatpush.xpose.msra.mxu0 0.0
        %440 = vmatpush.xpose.msra.mxu0 0.0
        %441 = vmatpush.xpose.msra.mxu0 0.0
        %442 = vmatpush.xpose.msra.mxu0 0.0
        %443 = vmatpush.xpose.msra.mxu0 0.0
        %444 = vmatpush.xpose.msra.mxu0 0.0
        %445 = vmatpush.xpose.msra.mxu0 0.0
        %446 = vmatpush.xpose.msra.mxu0 0.0
        %447 = vmatpush.xpose.msra.mxu0 0.0
        %448 = vmatpush.xpose.msra.mxu0 0.0
        %449 = vmatpush.xpose.msra.mxu0 0.0
        %450 = vmatpush.xpose.msra.mxu0 %v433
        %451 = vmatmul.f32.gmra.mxu0 %v430
        %v452 = vpop.f32.mrf.mxu0
        %v453 = vadd.f32 0.0, %v452
        %454 = vdwg.mxu0
        %v456 = vsel %vm270, %v328, 0
        %v459 = vsel %vm270, %v346, 0
        %461 = vmatpush.xpose.msra.mxu0 0.0
        %462 = vmatpush.xpose.msra.mxu0 0.0
        %463 = vmatpush.xpose.msra.mxu0 0.0
        %464 = vmatpush.xpose.msra.mxu0 0.0
        %465 = vmatpush.xpose.msra.mxu0 0.0
        %466 = vmatpush.xpose.msra.mxu0 0.0
        %467 = vmatpush.xpose.msra.mxu0 0.0
        %468 = vmatpush.xpose.msra.mxu0 0.0
        %469 = vmatpush.xpose.msra.mxu0 0.0
        %470 = vmatpush.xpose.msra.mxu0 0.0
        %471 = vmatpush.xpose.msra.mxu0 0.0
        %472 = vmatpush.xpose.msra.mxu0 0.0
        %473 = vmatpush.xpose.msra.mxu0 0.0
        %474 = vmatpush.xpose.msra.mxu0 0.0
        %475 = vmatpush.xpose.msra.mxu0 0.0
        %476 = vmatpush.xpose.msra.mxu0 %v459
        %477 = vmatmul.f32.gmra.mxu0 %v456
        %v478 = vpop.f32.mrf.mxu0
        %v479 = vadd.f32 0.0, %v478
        %480 = vdwg.mxu0
        %v482 = vsel %vm270, %v331, 0
        %v485 = vsel %vm270, %v347, 0
        %487 = vmatpush.xpose.msra.mxu0 0.0
        %488 = vmatpush.xpose.msra.mxu0 0.0
        %489 = vmatpush.xpose.msra.mxu0 0.0
        %490 = vmatpush.xpose.msra.mxu0 0.0
        %491 = vmatpush.xpose.msra.mxu0 0.0
        %492 = vmatpush.xpose.msra.mxu0 0.0
        %493 = vmatpush.xpose.msra.mxu0 0.0
        %494 = vmatpush.xpose.msra.mxu0 0.0
        %495 = vmatpush.xpose.msra.mxu0 0.0
        %496 = vmatpush.xpose.msra.mxu0 0.0
        %497 = vmatpush.xpose.msra.mxu0 0.0
        %498 = vmatpush.xpose.msra.mxu0 0.0
        %499 = vmatpush.xpose.msra.mxu0 0.0
        %500 = vmatpush.xpose.msra.mxu0 0.0
        %501 = vmatpush.xpose.msra.mxu0 0.0
        %502 = vmatpush.xpose.msra.mxu0 %v485
        %503 = vmatmul.f32.gmra.mxu0 %v482
        %v504 = vpop.f32.mrf.mxu0
        %v505 = vadd.f32 0.0, %v504
        %506 = vdwg.mxu0
        %v508 = vsel %vm270, %v334, 0
        %v511 = vsel %vm270, %v348, 0
        %513 = vmatpush.xpose.msra.mxu0 0.0
        %514 = vmatpush.xpose.msra.mxu0 0.0
        %515 = vmatpush.xpose.msra.mxu0 0.0
        %516 = vmatpush.xpose.msra.mxu0 0.0
        %517 = vmatpush.xpose.msra.mxu0 0.0
        %518 = vmatpush.xpose.msra.mxu0 0.0
        %519 = vmatpush.xpose.msra.mxu0 0.0
        %520 = vmatpush.xpose.msra.mxu0 0.0
        %521 = vmatpush.xpose.msra.mxu0 0.0
        %522 = vmatpush.xpose.msra.mxu0 0.0
        %523 = vmatpush.xpose.msra.mxu0 0.0
        %524 = vmatpush.xpose.msra.mxu0 0.0
        %525 = vmatpush.xpose.msra.mxu0 0.0
        %526 = vmatpush.xpose.msra.mxu0 0.0
        %527 = vmatpush.xpose.msra.mxu0 0.0
        %528 = vmatpush.xpose.msra.mxu0 %v511
        %529 = vmatmul.f32.gmra.mxu0 %v508
        %v530 = vpop.f32.mrf.mxu0
        %v531 = vadd.f32 0.0, %v530
        %532 = vdwg.mxu0
        %v534 = vsel %vm270, %v337, 0
        %v537 = vsel %vm270, %v349, 0
        %539 = vmatpush.xpose.msra.mxu0 0.0
        %540 = vmatpush.xpose.msra.mxu0 0.0
        %541 = vmatpush.xpose.msra.mxu0 0.0
        %542 = vmatpush.xpose.msra.mxu0 0.0
        %543 = vmatpush.xpose.msra.mxu0 0.0
        %544 = vmatpush.xpose.msra.mxu0 0.0
        %545 = vmatpush.xpose.msra.mxu0 0.0
        %546 = vmatpush.xpose.msra.mxu0 0.0
        %547 = vmatpush.xpose.msra.mxu0 0.0
        %548 = vmatpush.xpose.msra.mxu0 0.0
        %549 = vmatpush.xpose.msra.mxu0 0.0
        %550 = vmatpush.xpose.msra.mxu0 0.0
        %551 = vmatpush.xpose.msra.mxu0 0.0
        %552 = vmatpush.xpose.msra.mxu0 0.0
        %553 = vmatpush.xpose.msra.mxu0 0.0
        %554 = vmatpush.xpose.msra.mxu0 %v537
        %555 = vmatmul.f32.gmra.mxu0 %v534
        %v556 = vpop.f32.mrf.mxu0
        %v557 = vadd.f32 0.0, %v556
        %558 = vdwg.mxu0
        %v560 = vsel %vm270, %v340, 0
        %v563 = vsel %vm270, %v350, 0
        %565 = vmatpush.xpose.msra.mxu0 0.0
        %566 = vmatpush.xpose.msra.mxu0 0.0
        %567 = vmatpush.xpose.msra.mxu0 0.0
        %568 = vmatpush.xpose.msra.mxu0 0.0
        %569 = vmatpush.xpose.msra.mxu0 0.0
        %570 = vmatpush.xpose.msra.mxu0 0.0
        %571 = vmatpush.xpose.msra.mxu0 0.0
        %572 = vmatpush.xpose.msra.mxu0 0.0
        %573 = vmatpush.xpose.msra.mxu0 0.0
        %574 = vmatpush.xpose.msra.mxu0 0.0
        %575 = vmatpush.xpose.msra.mxu0 0.0
        %576 = vmatpush.xpose.msra.mxu0 0.0
        %577 = vmatpush.xpose.msra.mxu0 0.0
        %578 = vmatpush.xpose.msra.mxu0 0.0
        %579 = vmatpush.xpose.msra.mxu0 0.0
        %580 = vmatpush.xpose.msra.mxu0 %v563
        %581 = vmatmul.f32.gmra.mxu0 %v560
        %v582 = vpop.f32.mrf.mxu0
        %v583 = vadd.f32 0.0, %v582
        %584 = vdwg.mxu0
        %vm585 = vcmask 64512
        %586 = vst.msk [vmem:[%s258] sm:$0xff] %vm585, %v375
        %587 = vst.msk [vmem:[%s258 + $0x8] sm:$0xff] %vm585, %v401
        %588 = vst.msk [vmem:[%s258 + $0x10] sm:$0xff] %vm585, %v427
        %589 = vst.msk [vmem:[%s258 + $0x18] sm:$0xff] %vm585, %v453
        %590 = vst.msk [vmem:[%s258 + $0x20] sm:$0xff] %vm585, %v479
        %591 = vst.msk [vmem:[%s258 + $0x28] sm:$0xff] %vm585, %v505
        %592 = vst.msk [vmem:[%s258 + $0x30] sm:$0xff] %vm585, %v531
        %593 = vst.msk [vmem:[%s258 + $0x38] sm:$0xff] %vm585, %v557
        %594 = vst.msk [vmem:[%s258 + $0x40] sm:$0xff] %vm585, %v583
        %p595 = scmp.lt.s32.totalorder %s21, 1
        %s596 = scalar_select %p595, %s21, 1
        %p597 = scmp.lt.s32.totalorder %s22, 3
        %s598 = scalar_select %p597, %s22, 3
        %s599 = smul.addr %s598, 9
        %s600 = smul.addr %s596, 36
        %s601 = sadd.s32 %s599, %s600
        %s602 = smul.addr %s601, 8
        %s603 = scalar_lea.vmem %s3, %s602
        // Predicated region
        $region37: #{tpu_custom_call.1} parent=31 // pred_check
          %p604 = pneg %p129
        $region38: #{tpu_custom_call.1} parent=31 // pred_check_branch
          %606 = sbr.rel (%p604) target = $region40
        $region39: #{tpu_custom_call.1} parent=31 // pred_region
          _
        $region40: #{tpu_custom_call.1} parent=31 // pred_fallthru
          _
      $region32: #{tpu_custom_call.1} parent=5 // pred_fallthru
        _
      %p607 = scmp.le.s32.totalorder 2, %s12
      // Predicated region
      $region41: #{tpu_custom_call.1} parent=5 // pred_check
        %p608 = pneg %p607
      $region42: #{tpu_custom_call.1} parent=5 // pred_check_branch
        %610 = sbr.rel (%p608) target = $region44
      $region43: #{tpu_custom_call.1} parent=5 // pred_region
        %s611 = ssub.s32 %s12, 2
        // Predicated region
        $region45: #{tpu_custom_call.1} parent=43 // pred_check
          %p612 = pneg %p135
        $region46: #{tpu_custom_call.1} parent=43 // pred_check_branch
          %614 = sbr.rel (%p612) target = $region48
        $region47: #{tpu_custom_call.1} parent=43 // pred_region
          %p615 = scmp.lt.s32.totalorder %s23, 1
          %s616 = scalar_select %p615, %s23, 1
          %p617 = scmp.lt.s32.totalorder %s24, 3
          %s618 = scalar_select %p617, %s24, 3
          %s619 = smul.addr %s618, 9
          %s620 = smul.addr %s616, 36
          %s621 = sadd.s32 %s619, %s620
          %s622 = smul.addr %s621, 8
          %s623 = scalar_lea.vmem %s3, %s622
        $region48: #{tpu_custom_call.1} parent=43 // pred_fallthru
          _
      $region44: #{tpu_custom_call.1} parent=5 // pred_fallthru
        _
    $region6: #{tpu_custom_call.1} parent=1 // loop_footer
      %s16 = sadd.s32 1, %s12
    $region7: #{tpu_custom_call.1} parent=1 // loop_footer_branch
      %11 = sbr.rel target = $region3
    $region8: #{tpu_custom_call.1} parent=1 // loop_exit
      _
    %624 = vsyncpa [#allocation3], 1
    %s625 = scalar_lea.sflag [#allocation3], 1
    %626 = vsyncpa %s625, 1

</llo_original>
